<compile_context>
chip_gen: v7x
topology: tpu7x:2x2x1
jax: 0.10.0
libtpu: 0.0.40
codegen_flags: <defaults>
</compile_context>

<pallas_src>
import jax
import jax.numpy as jnp
from jax.experimental import pallas as pl
from jax.experimental.pallas import tpu as pltpu

BN_EPS = 1e-5


# ---------------------------------------------------------------------------
# 3-D path: per-task input slices, grid over selected tasks.
# ---------------------------------------------------------------------------
def _mrn_task_kernel(ids_ref, x_ref, w_ref, b_ref, gamma_ref, beta_ref,
                     o_ref, sum_scr, ssq_scr):
    """One grid step = one selected task.

    ids_ref   : (T_sel,) int32 SMEM   (consumed by the index_maps)
    x_ref     : (1, B, D_in)     bf16  this task's input slice
    w_ref     : (1, D_out, D_in) bf16  this task's Linear weight
    b_ref     : (1, 1, D_out)    f32   this task's Linear bias
    gamma_ref : (1, D_out)       f32   BN weight (resident)
    beta_ref  : (1, D_out)       f32   BN bias   (resident)
    o_ref     : (B, T_sel, D_out) f32  resident output block (also stages pre-BN feats)
    sum_scr   : (1, D_out) f32   streamed sum of features
    ssq_scr   : (1, D_out) f32   streamed sum of squared features
    """
    t = pl.program_id(0)
    batch, t_sel, _ = o_ref.shape

    # Linear on the MXU: bf16 inputs, f32 accumulation; contraction over D_in expressed
    # via dimension_numbers so there is no w.T relayout inside the kernel.
    y = jax.lax.dot_general(
        x_ref[0], w_ref[0],
        dimension_numbers=(((1,), (1,)), ((), ())),
        preferred_element_type=jnp.float32)                     # (B, D_out) f32
    f = jnp.maximum(y + b_ref[0], 0.0)                          # bias + ReLU in f32

    # Streamed BN statistics (per output channel, pooled over all B*T_sel rows).
    @pl.when(t == 0)
    def _():
        sum_scr[...] = jnp.zeros_like(sum_scr)
        ssq_scr[...] = jnp.zeros_like(ssq_scr)

    sum_scr[...] += jnp.sum(f, axis=0, keepdims=True)
    ssq_scr[...] += jnp.sum(f * f, axis=0, keepdims=True)

    # Stage pre-BN features directly into the resident output block (no extra feature
    # scratch). Static-index stores guarded by pl.when keep the lowering simple; T_sel
    # (num_tasks) is small so the unroll is tiny.
    def _stage(i):
        @pl.when(t == i)
        def _():
            o_ref[:, i, :] = f

    for i in range(t_sel):
        _stage(i)

    # Finalize on the last task: BN affine from the streamed sums, then ONE full-block
    # normalize + store of the resident output, already in (B, T_sel, D_out) layout.
    @pl.when(t == t_sel - 1)
    def _():
        inv_n = 1.0 / float(t_sel * batch)
        mean = sum_scr[...] * inv_n                              # (1, D_out)
        var = ssq_scr[...] * inv_n - mean * mean
        scale = jax.lax.rsqrt(var + BN_EPS) * gamma_ref[...]
        shift = beta_ref[...] - mean * scale
        o_ref[...] = o_ref[...] * scale[None] + shift[None]


@jax.jit
def _mrn_forward_tasks(x, task_ids, W, b, gamma, beta):
    """x: (B, T, D_in); task_ids: (T_sel,) int array; module does x[:, id, :] per id."""
    num_tasks, d_out, d_in = W.shape
    t_sel = task_ids.shape[0]
    batch = x.shape[0]

    # Tasks-major view so each grid step's x block is a full (B, D_in) slab.
    # TODO(synk): DMA straight from (B, T, D_in) with a size-1 second-minor block once
    #             confirmed supported; for now XLA can fuse this transpose with the cast.
    x_tasks = jnp.transpose(x, (1, 0, 2)).astype(jnp.bfloat16)   # (T, B, D_in)
    w_bf16 = W.astype(jnp.bfloat16)
    b_r = b.reshape(num_tasks, 1, d_out).astype(jnp.float32)
    g_r = gamma.reshape(1, d_out).astype(jnp.float32)
    be_r = beta.reshape(1, d_out).astype(jnp.float32)

    return pl.pallas_call(
        _mrn_task_kernel,
        out_shape=jax.ShapeDtypeStruct((batch, t_sel, d_out), jnp.float32),
        grid_spec=pltpu.PrefetchScalarGridSpec(
            num_scalar_prefetch=1,                               # task_ids -> SMEM
            grid=(t_sel,),
            in_specs=[
                pl.BlockSpec((1, batch, d_in), lambda t, ids: (ids[t], 0, 0)),
                pl.BlockSpec((1, d_out, d_in), lambda t, ids: (ids[t], 0, 0)),
                pl.BlockSpec((1, 1, d_out), lambda t, ids: (ids[t], 0, 0)),
                pl.BlockSpec((1, d_out), lambda t, ids: (0, 0)),
                pl.BlockSpec((1, d_out), lambda t, ids: (0, 0)),
            ],
            out_specs=pl.BlockSpec((batch, t_sel, d_out), lambda t, ids: (0, 0, 0)),
            scratch_shapes=[pltpu.VMEM((1, d_out), jnp.float32),
                            pltpu.VMEM((1, d_out), jnp.float32)],
        ),
        compiler_params=pltpu.CompilerParams(
            # the task axis carries the resident output block + streamed BN scratches
            dimension_semantics=("arbitrary",),
            vmem_limit_bytes=32 * 1024 * 1024,
        ),
    )(task_ids.astype(jnp.int32), x_tasks, w_bf16, b_r, g_r, be_r)


# ---------------------------------------------------------------------------
# 2-D path (shared input through every selected Linear) and int taskID:
# single kernel invocation, one wide MXU matmul, lane-dense output.
# ---------------------------------------------------------------------------
def _mrn_shared_kernel(x_ref, w_ref, b_ref, gamma_ref, beta_ref, o_ref):
    """x_ref: (B, D_in) bf16; w_ref: (T_sel*D_out, D_in) bf16; b_ref: (1, T_sel*D_out);
    gamma_ref/beta_ref: (1, D_out); o_ref: (B, T_sel*D_out) f32 (lane-dense)."""
    batch = x_ref.shape[0]
    d_out = gamma_ref.shape[-1]
    t_sel = o_ref.shape[-1] // d_out

    # One wide matmul: (B, D_in) x (D_in, T_sel*D_out) on the MXU, f32 accumulation.
    y = jax.lax.dot_general(
        x_ref[...], w_ref[...],
        dimension_numbers=(((1,), (1,)), ((), ())),
        preferred_element_type=jnp.float32)                      # (B, T_sel*D_out)
    f = jnp.maximum(y + b_ref[...], 0.0)

    # BN stats pooled per channel across the T_sel lane groups (static lane slices).
    colsum = jnp.sum(f, axis=0, keepdims=True)                   # (1, T_sel*D_out)
    colssq = jnp.sum(f * f, axis=0, keepdims=True)
    s = jnp.zeros((1, d_out), jnp.float32)
    q = jnp.zeros((1, d_out), jnp.float32)
    for i in range(t_sel):
        s = s + colsum[:, i * d_out:(i + 1) * d_out]
        q = q + colssq[:, i * d_out:(i + 1) * d_out]

    inv_n = 1.0 / float(batch * t_sel)
    mean = s * inv_n
    var = q * inv_n - mean * mean
    scale = jax.lax.rsqrt(var + BN_EPS) * gamma_ref[...]         # (1, D_out)
    shift = beta_ref[...] - mean * scale
    scale_t = jnp.concatenate([scale] * t_sel, axis=1)           # (1, T_sel*D_out)
    shift_t = jnp.concatenate([shift] * t_sel, axis=1)

    # Single contiguous, lane-dense store of the whole output block.
    o_ref[...] = (f * scale_t + shift_t).astype(o_ref.dtype)


@jax.jit
def _mrn_forward_shared(x, task_ids, W, b, gamma, beta):
    """x: (B, D_in); same input pushed through every selected Linear."""
    num_tasks, d_out, d_in = W.shape
    t_sel = task_ids.shape[0]
    batch = x.shape[0]

    # Wrapper gather is fine at this size; fuses with the bf16 cast.
    w_sel = W[task_ids].reshape(t_sel * d_out, d_in).astype(jnp.bfloat16)
    b_sel = b[task_ids].reshape(1, t_sel * d_out).astype(jnp.float32)
    g_r = gamma.reshape(1, d_out).astype(jnp.float32)
    be_r = beta.reshape(1, d_out).astype(jnp.float32)

    out2d = pl.pallas_call(
        _mrn_shared_kernel,
        out_shape=jax.ShapeDtypeStruct((batch, t_sel * d_out), jnp.float32),
    )(x.astype(jnp.bfloat16), w_sel, b_sel, g_r, be_r)

    # Free row-major reshape back to the PyTorch (B, T_sel, D_out) layout.
    return out2d.reshape(batch, t_sel, d_out)


# ---------------------------------------------------------------------------
# Dispatcher matching MRN_Linear.forward.
# ---------------------------------------------------------------------------
def mrn_linear_forward(x, task_ids, W, b, gamma, beta):
    """task_ids: Python int (2-D x only) or int tensor of task ids."""
    if isinstance(task_ids, int):
        if x.ndim != 2:
            raise ValueError("Input must be [batch, features] when taskID is an int.")
        out = _mrn_forward_shared(x, jnp.array([task_ids], jnp.int32),
                                  W, b, gamma, beta)
        return out[:, 0, :]
    task_ids = jnp.asarray(task_ids, jnp.int32)
    if x.ndim == 2:
        return _mrn_forward_shared(x, task_ids, W, b, gamma, beta)
    return _mrn_forward_tasks(x, task_ids, W, b, gamma, beta)


# ---------------------------------------------------------------------------
# Pure-JAX reference mirroring the kernel numerics (bf16 matmul inputs, f32 math).
# ---------------------------------------------------------------------------
def _ref_forward(x, task_ids, W, b, gamma, beta):
    if x.ndim == 2:
        x_sel = jnp.broadcast_to(x[:, None, :],
                                 (x.shape[0], task_ids.shape[0], x.shape[1]))
    else:
        x_sel = x[:, task_ids, :]
    W_sel = W[task_ids]
    b_sel = b[task_ids]
    feats = jnp.einsum("btd,tod->bto",
                       x_sel.astype(jnp.bfloat16), W_sel.astype(jnp.bfloat16),
                       preferred_element_type=jnp.float32) + b_sel[None]
    feats = jnp.maximum(feats, 0.0)
    flat = feats.reshape(-1, feats.shape[-1])
    mean = flat.mean(axis=0)
    var = ((flat - mean) ** 2).mean(axis=0)
    return (feats - mean) / jnp.sqrt(var + BN_EPS) * gamma + beta


if __name__ == "__main__":
    # small shapes consistent with the module: in_features=32, out_features=16, tasks=3
    B, T, D_in, D_out = 8, 3, 32, 16

    key = jax.random.PRNGKey(0)
    kx, kw, kb, kx2 = jax.random.split(key, 4)

    x = jax.random.normal(kx, (B, T, D_in), dtype=jnp.float32)
    task_ids = jnp.arange(T, dtype=jnp.int32)

    # nn.Linear default init: U(-1/sqrt(in_features), 1/sqrt(in_features))
    bound = 1.0 / (D_in ** 0.5)
    W = jax.random.uniform(kw, (T, D_out, D_in), jnp.float32, -bound, bound)
    b = jax.random.uniform(kb, (T, D_out), jnp.float32, -bound, bound)
    gamma = jnp.ones((D_out,), jnp.float32)   # BatchNorm1d default affine
    beta = jnp.zeros((D_out,), jnp.float32)

    # 3-D input, tensor taskID (main path: task grid, streamed BN, resident output)
    out = jax.block_until_ready(mrn_linear_forward(x, task_ids, W, b, gamma, beta))
    ref = _ref_forward(x, task_ids, W, b, gamma, beta)
    assert out.shape == (B, T, D_out)
    assert jnp.allclose(out, ref, atol=1e-2, rtol=1e-2), (
        f"3-D path mismatch, max |diff| = {jnp.max(jnp.abs(out - ref))}")

    # 2-D input, tensor taskID (collapsed single-shot kernel, lane-dense output)
    x2 = jax.random.normal(kx2, (B, D_in), dtype=jnp.float32)
    out2 = jax.block_until_ready(mrn_linear_forward(x2, task_ids, W, b, gamma, beta))
    ref2 = _ref_forward(x2, task_ids, W, b, gamma, beta)
    assert out2.shape == (B, T, D_out)
    assert jnp.allclose(out2, ref2, atol=1e-2, rtol=1e-2), (
        f"2-D path mismatch, max |diff| = {jnp.max(jnp.abs(out2 - ref2))}")

    # 2-D input, int taskID (single Linear + BN over the batch)
    out3 = jax.block_until_ready(mrn_linear_forward(x2, 1, W, b, gamma, beta))
    ref3 = _ref_forward(x2, jnp.array([1], jnp.int32), W, b, gamma, beta)[:, 0, :]
    assert out3.shape == (B, D_out)
    assert jnp.allclose(out3, ref3, atol=1e-2, rtol=1e-2), (
        f"int-taskID path mismatch, max |diff| = {jnp.max(jnp.abs(out3 - ref3))}")

    print("KERNEL_OK")
</pallas_src>

<mosaic_0001>
module attributes {stable_mosaic.version = 11 : i64} {
  func.func @_mrn_task_kernel(%arg0: i32, %arg1: memref<3xi32, #tpu.memory_space<smem>>, %arg2: memref<1x8x32xbf16, #tpu.memory_space<vmem>>, %arg3: memref<1x16x32xbf16, #tpu.memory_space<vmem>>, %arg4: memref<1x1x16xf32, #tpu.memory_space<vmem>>, %arg5: memref<1x16xf32, #tpu.memory_space<vmem>>, %arg6: memref<1x16xf32, #tpu.memory_space<vmem>>, %arg7: memref<8x3x16xf32, #tpu.memory_space<vmem>>, %arg8: memref<1x16xf32, #tpu.memory_space<vmem>>, %arg9: memref<1x16xf32, #tpu.memory_space<vmem>>) attributes {dimension_semantics = [#tpu.dimension_semantics<arbitrary>], iteration_bounds = array<i64: 3>, scalar_prefetch = 1 : i64, scratch_operands = 2 : i64, tpu.core_type = #tpu.core_type<tc>, window_params = [{transform_indices = @transform_0, window_bounds = array<i64: 1, 8, 32>}, {transform_indices = @transform_1, window_bounds = array<i64: 1, 16, 32>}, {transform_indices = @transform_2, window_bounds = array<i64: 1, 1, 16>}, {pipeline_mode = #tpu.pipeline_mode<synchronous>, transform_indices = @transform_3, window_bounds = array<i64: 1, 16>}, {pipeline_mode = #tpu.pipeline_mode<synchronous>, transform_indices = @transform_4, window_bounds = array<i64: 1, 16>}, {pipeline_mode = #tpu.pipeline_mode<synchronous>, transform_indices = @transform_5, window_bounds = array<i64: 8, 3, 16>}]} {
    %c0 = arith.constant 0 : index
    %c0_0 = arith.constant 0 : index
    %c0_1 = arith.constant 0 : index
    %0 = vector.load %arg2[%c0, %c0_0, %c0_1] : memref<1x8x32xbf16, #tpu.memory_space<vmem>>, vector<1x8x32xbf16>
    %1 = vector.shape_cast %0 : vector<1x8x32xbf16> to vector<8x32xbf16>
    %c0_2 = arith.constant 0 : index
    %c0_3 = arith.constant 0 : index
    %c0_4 = arith.constant 0 : index
    %2 = vector.load %arg3[%c0_2, %c0_3, %c0_4] : memref<1x16x32xbf16, #tpu.memory_space<vmem>>, vector<1x16x32xbf16>
    %3 = vector.shape_cast %2 : vector<1x16x32xbf16> to vector<16x32xbf16>
    %cst = arith.constant dense<0.000000e+00> : vector<8x16xf32>
    %4 = tpu.matmul %1, %3, %cst {dimension_numbers = #tpu.dot_dimension_numbers<[1], [1], [0], [0], [0, 0, 1, 0], [], []>} : vector<8x32xbf16>, vector<16x32xbf16>, vector<8x16xf32> -> vector<8x16xf32>
    %c0_5 = arith.constant 0 : index
    %c0_6 = arith.constant 0 : index
    %c0_7 = arith.constant 0 : index
    %5 = vector.load %arg4[%c0_5, %c0_6, %c0_7] : memref<1x1x16xf32, #tpu.memory_space<vmem>>, vector<1x1x16xf32>
    %6 = vector.shape_cast %5 : vector<1x1x16xf32> to vector<1x16xf32>
    %7 = vector.broadcast %6 : vector<1x16xf32> to vector<8x16xf32>
    %8 = arith.addf %4, %7 : vector<8x16xf32>
    %cst_8 = arith.constant 0.000000e+00 : f32
    %9 = vector.broadcast %cst_8 : f32 to vector<8x16xf32>
    %10 = arith.maximumf %8, %9 : vector<8x16xf32>
    %c0_i32 = arith.constant 0 : i32
    %11 = arith.cmpi eq, %arg0, %c0_i32 : i32
    %12 = arith.extui %11 : i1 to i32
    %c0_i32_9 = arith.constant 0 : i32
    %13 = arith.cmpi ne, %12, %c0_i32_9 : i32
    scf.if %13 {
      %cst_26 = arith.constant 0.000000e+00 : f32
      %37 = vector.broadcast %cst_26 : f32 to vector<1x16xf32>
      %c0_27 = arith.constant 0 : index
      %c0_28 = arith.constant 0 : index
      %38 = vector.load %arg8[%c0_27, %c0_28] : memref<1x16xf32, #tpu.memory_space<vmem>>, vector<1x16xf32>
      tpu.vector_store %arg8[%c0_27, %c0_28], %37 {strides = array<i32>} : memref<1x16xf32, #tpu.memory_space<vmem>>, vector<1x16xf32>,
      %cst_29 = arith.constant 0.000000e+00 : f32
      %39 = vector.broadcast %cst_29 : f32 to vector<1x16xf32>
      %c0_30 = arith.constant 0 : index
      %c0_31 = arith.constant 0 : index
      %40 = vector.load %arg9[%c0_30, %c0_31] : memref<1x16xf32, #tpu.memory_space<vmem>>, vector<1x16xf32>
      tpu.vector_store %arg9[%c0_30, %c0_31], %39 {strides = array<i32>} : memref<1x16xf32, #tpu.memory_space<vmem>>, vector<1x16xf32>,
    } else {
    }
    %c0_10 = arith.constant 0 : index
    %c0_11 = arith.constant 0 : index
    %14 = vector.load %arg8[%c0_10, %c0_11] : memref<1x16xf32, #tpu.memory_space<vmem>>, vector<1x16xf32>
    %cst_12 = arith.constant dense<0.000000e+00> : vector<16xf32>
    %15 = vector.multi_reduction <add>, %10, %cst_12 [0] : vector<8x16xf32> to vector<16xf32>
    %16 = vector.shape_cast %15 : vector<16xf32> to vector<1x16xf32>
    %17 = arith.addf %14, %16 : vector<1x16xf32>
    %c0_13 = arith.constant 0 : index
    %c0_14 = arith.constant 0 : index
    %18 = vector.load %arg8[%c0_13, %c0_14] : memref<1x16xf32, #tpu.memory_space<vmem>>, vector<1x16xf32>
    tpu.vector_store %arg8[%c0_13, %c0_14], %17 {strides = array<i32>} : memref<1x16xf32, #tpu.memory_space<vmem>>, vector<1x16xf32>,
    %c0_15 = arith.constant 0 : index
    %c0_16 = arith.constant 0 : index
    %19 = vector.load %arg9[%c0_15, %c0_16] : memref<1x16xf32, #tpu.memory_space<vmem>>, vector<1x16xf32>
    %20 = arith.mulf %10, %10 : vector<8x16xf32>
    %cst_17 = arith.constant dense<0.000000e+00> : vector<16xf32>
    %21 = vector.multi_reduction <add>, %20, %cst_17 [0] : vector<8x16xf32> to vector<16xf32>
    %22 = vector.shape_cast %21 : vector<16xf32> to vector<1x16xf32>
    %23 = arith.addf %19, %22 : vector<1x16xf32>
    %c0_18 = arith.constant 0 : index
    %c0_19 = arith.constant 0 : index
    %24 = vector.load %arg9[%c0_18, %c0_19] : memref<1x16xf32, #tpu.memory_space<vmem>>, vector<1x16xf32>
    tpu.vector_store %arg9[%c0_18, %c0_19], %23 {strides = array<i32>} : memref<1x16xf32, #tpu.memory_space<vmem>>, vector<1x16xf32>,
    %c0_i32_20 = arith.constant 0 : i32
    %25 = arith.cmpi eq, %arg0, %c0_i32_20 : i32
    %26 = arith.extui %25 : i1 to i32
    %c0_i32_21 = arith.constant 0 : i32
    %27 = arith.cmpi ne, %26, %c0_i32_21 : i32
    scf.if %27 {
      %c0_26 = arith.constant 0 : index
      %c0_27 = arith.constant 0 : index
      %c0_28 = arith.constant 0 : index
      %37 = vector.load %arg7[%c0_26, %c0_27, %c0_28] : memref<8x3x16xf32, #tpu.memory_space<vmem>>, vector<8x1x16xf32>
      %38 = vector.shape_cast %37 : vector<8x1x16xf32> to vector<8x16xf32>
      %39 = vector.shape_cast %10 : vector<8x16xf32> to vector<8x1x16xf32>
      tpu.vector_store %arg7[%c0_26, %c0_27, %c0_28], %39 {strides = array<i32>} : memref<8x3x16xf32, #tpu.memory_space<vmem>>, vector<8x1x16xf32>,
    } else {
    }
    %c1_i32 = arith.constant 1 : i32
    %28 = arith.cmpi eq, %arg0, %c1_i32 : i32
    %29 = arith.extui %28 : i1 to i32
    %c0_i32_22 = arith.constant 0 : i32
    %30 = arith.cmpi ne, %29, %c0_i32_22 : i32
    scf.if %30 {
      %c0_26 = arith.constant 0 : index
      %c1 = arith.constant 1 : index
      %c0_27 = arith.constant 0 : index
      %37 = vector.load %arg7[%c0_26, %c1, %c0_27] : memref<8x3x16xf32, #tpu.memory_space<vmem>>, vector<8x1x16xf32>
      %38 = vector.shape_cast %37 : vector<8x1x16xf32> to vector<8x16xf32>
      %39 = vector.shape_cast %10 : vector<8x16xf32> to vector<8x1x16xf32>
      tpu.vector_store %arg7[%c0_26, %c1, %c0_27], %39 {strides = array<i32>} : memref<8x3x16xf32, #tpu.memory_space<vmem>>, vector<8x1x16xf32>,
    } else {
    }
    %c2_i32 = arith.constant 2 : i32
    %31 = arith.cmpi eq, %arg0, %c2_i32 : i32
    %32 = arith.extui %31 : i1 to i32
    %c0_i32_23 = arith.constant 0 : i32
    %33 = arith.cmpi ne, %32, %c0_i32_23 : i32
    scf.if %33 {
      %c0_26 = arith.constant 0 : index
      %c2 = arith.constant 2 : index
      %c0_27 = arith.constant 0 : index
      %37 = vector.load %arg7[%c0_26, %c2, %c0_27] : memref<8x3x16xf32, #tpu.memory_space<vmem>>, vector<8x1x16xf32>
      %38 = vector.shape_cast %37 : vector<8x1x16xf32> to vector<8x16xf32>
      %39 = vector.shape_cast %10 : vector<8x16xf32> to vector<8x1x16xf32>
      tpu.vector_store %arg7[%c0_26, %c2, %c0_27], %39 {strides = array<i32>} : memref<8x3x16xf32, #tpu.memory_space<vmem>>, vector<8x1x16xf32>,
    } else {
    }
    %c2_i32_24 = arith.constant 2 : i32
    %34 = arith.cmpi eq, %arg0, %c2_i32_24 : i32
    %35 = arith.extui %34 : i1 to i32
    %c0_i32_25 = arith.constant 0 : i32
    %36 = arith.cmpi ne, %35, %c0_i32_25 : i32
    scf.if %36 {
      %c0_26 = arith.constant 0 : index
      %c0_27 = arith.constant 0 : index
      %37 = vector.load %arg8[%c0_26, %c0_27] : memref<1x16xf32, #tpu.memory_space<vmem>>, vector<1x16xf32>
      %cst_28 = arith.constant 0.0416666679 : f32
      %38 = vector.broadcast %cst_28 : f32 to vector<1x16xf32>
      %39 = arith.mulf %37, %38 : vector<1x16xf32>
      %c0_29 = arith.constant 0 : index
      %c0_30 = arith.constant 0 : index
      %40 = vector.load %arg9[%c0_29, %c0_30] : memref<1x16xf32, #tpu.memory_space<vmem>>, vector<1x16xf32>
      %cst_31 = arith.constant 0.0416666679 : f32
      %41 = vector.broadcast %cst_31 : f32 to vector<1x16xf32>
      %42 = arith.mulf %40, %41 : vector<1x16xf32>
      %43 = arith.mulf %39, %39 : vector<1x16xf32>
      %44 = arith.subf %42, %43 : vector<1x16xf32>
      %cst_32 = arith.constant 9.99999974E-6 : f32
      %45 = vector.broadcast %cst_32 : f32 to vector<1x16xf32>
      %46 = arith.addf %44, %45 : vector<1x16xf32>
      %47 = math.rsqrt %46 : vector<1x16xf32>
      %c0_33 = arith.constant 0 : index
      %c0_34 = arith.constant 0 : index
      %48 = vector.load %arg5[%c0_33, %c0_34] : memref<1x16xf32, #tpu.memory_space<vmem>>, vector<1x16xf32>
      %49 = arith.mulf %47, %48 : vector<1x16xf32>
      %c0_35 = arith.constant 0 : index
      %c0_36 = arith.constant 0 : index
      %50 = vector.load %arg6[%c0_35, %c0_36] : memref<1x16xf32, #tpu.memory_space<vmem>>, vector<1x16xf32>
      %51 = arith.mulf %39, %49 : vector<1x16xf32>
      %52 = arith.subf %50, %51 : vector<1x16xf32>
      %c0_37 = arith.constant 0 : index
      %c0_38 = arith.constant 0 : index
      %c0_39 = arith.constant 0 : index
      %53 = vector.load %arg7[%c0_37, %c0_38, %c0_39] : memref<8x3x16xf32, #tpu.memory_space<vmem>>, vector<8x3x16xf32>
      %54 = vector.shape_cast %49 : vector<1x16xf32> to vector<1x1x16xf32>
      %55 = vector.broadcast %54 : vector<1x1x16xf32> to vector<8x3x16xf32>
      %56 = arith.mulf %53, %55 : vector<8x3x16xf32>
      %57 = vector.shape_cast %52 : vector<1x16xf32> to vector<1x1x16xf32>
      %58 = vector.broadcast %57 : vector<1x1x16xf32> to vector<8x3x16xf32>
      %59 = arith.addf %56, %58 : vector<8x3x16xf32>
      %c0_40 = arith.constant 0 : index
      %c0_41 = arith.constant 0 : index
      %c0_42 = arith.constant 0 : index
      %60 = vector.load %arg7[%c0_40, %c0_41, %c0_42] : memref<8x3x16xf32, #tpu.memory_space<vmem>>, vector<8x3x16xf32>
      tpu.vector_store %arg7[%c0_40, %c0_41, %c0_42], %59 {strides = array<i32>} : memref<8x3x16xf32, #tpu.memory_space<vmem>>, vector<8x3x16xf32>,
    } else {
    }
    return
  }
  func.func @transform_0(%arg0: i32, %arg1: memref<3xi32, #tpu.memory_space<smem>>) -> (i32, i32, i32) {
    %0 = arith.index_cast %arg0 : i32 to index
    %1 = memref.load %arg1[%0] : memref<3xi32, #tpu.memory_space<smem>>
    %c0_i32 = arith.constant 0 : i32
    %c0_i32_0 = arith.constant 0 : i32
    %c0_i32_1 = arith.constant 0 : i32
    return %1, %c0_i32, %c0_i32_0 : i32, i32, i32
  }
  func.func @transform_1(%arg0: i32, %arg1: memref<3xi32, #tpu.memory_space<smem>>) -> (i32, i32, i32) {
    %0 = arith.index_cast %arg0 : i32 to index
    %1 = memref.load %arg1[%0] : memref<3xi32, #tpu.memory_space<smem>>
    %c0_i32 = arith.constant 0 : i32
    %c0_i32_0 = arith.constant 0 : i32
    %c0_i32_1 = arith.constant 0 : i32
    return %1, %c0_i32, %c0_i32_0 : i32, i32, i32
  }
  func.func @transform_2(%arg0: i32, %arg1: memref<3xi32, #tpu.memory_space<smem>>) -> (i32, i32, i32) {
    %0 = arith.index_cast %arg0 : i32 to index
    %1 = memref.load %arg1[%0] : memref<3xi32, #tpu.memory_space<smem>>
    %c0_i32 = arith.constant 0 : i32
    %c0_i32_0 = arith.constant 0 : i32
    %c0_i32_1 = arith.constant 0 : i32
    return %1, %c0_i32, %c0_i32_0 : i32, i32, i32
  }
  func.func @transform_3(%arg0: i32, %arg1: memref<3xi32, #tpu.memory_space<smem>>) -> (i32, i32) {
    %c0_i32 = arith.constant 0 : i32
    %c0_i32_0 = arith.constant 0 : i32
    %c0_i32_1 = arith.constant 0 : i32
    return %c0_i32, %c0_i32_0 : i32, i32
  }
  func.func @transform_4(%arg0: i32, %arg1: memref<3xi32, #tpu.memory_space<smem>>) -> (i32, i32) {
    %c0_i32 = arith.constant 0 : i32
    %c0_i32_0 = arith.constant 0 : i32
    %c0_i32_1 = arith.constant 0 : i32
    return %c0_i32, %c0_i32_0 : i32, i32
  }
  func.func @transform_5(%arg0: i32, %arg1: memref<3xi32, #tpu.memory_space<smem>>) -> (i32, i32, i32) {
    %c0_i32 = arith.constant 0 : i32
    %c0_i32_0 = arith.constant 0 : i32
    %c0_i32_1 = arith.constant 0 : i32
    %c0_i32_2 = arith.constant 0 : i32
    return %c0_i32, %c0_i32_0, %c0_i32_1 : i32, i32, i32
  }
}

</mosaic_0001>

<llo_original>
// kernel: _mrn_forward_tasks.1
$region0: #{_mrn_forward_tasks.1}
  #allocation0 [shape = 'u32[]', space=smem, size = 0x4, offset = 0x4, fixed_abs, tag = 'smem constant byte address 0x4 - core index']
  #allocation1 [shape = 'u32[144,128]{1,0:T(1,128)}', space=vmem, size = 0x12000, scoped, tag = 'internal scratch']
  #allocation2 [shape = 'f32[1,16]{1,0:T(1,128)}', space=vmem, size = 0x200, scoped, tag = 'scratch operand']
  #allocation3 [shape = 'f32[1,16]{1,0:T(1,128)}', space=vmem, size = 0x200, scoped, tag = 'scratch operand']
  #allocation4 [shape = 's32[1]{0}', space=sflag, size = 0x4, scoped, tag = 'scoped memory for _mrn_forward_tasks.1']
  #allocation5 [shape = 'u8[512]{0}', space=smem, size = 0x200, scoped, tag = 'prefetched SMEM operand 0']
  %s0 = inlined_call_operand.vmem [shape: s32[3], index: 0, kind: input, shape index: {}]
  %s1 = inlined_call_operand.vmem [shape: bf16[3,8,32], index: 1, kind: input, shape index: {}]
  %s2 = inlined_call_operand.vmem [shape: bf16[3,16,32], index: 2, kind: input, shape index: {}]
  %s3 = inlined_call_operand.vmem [shape: f32[3,1,16], index: 3, kind: input, shape index: {}]
  %s4 = inlined_call_operand.vmem [shape: f32[1,16], index: 4, kind: input, shape index: {}]
  %s5 = inlined_call_operand.vmem [shape: f32[1,16], index: 5, kind: input, shape index: {}]
  %s6 = inlined_call_operand.vmem [shape: f32[8,3,16], index: 6, kind: output, shape index: {}]
  %s7 = sld [smem:[#allocation0]]
  $region69: #{_mrn_forward_tasks.1} parent=0
    _
  %s9 = ssub.s32 1, %s7
  %s10 = scalar_select 0, %s9, %s7
  %s11 = sshll.u32 %s0, 4
  %s12 = int_to_ptr.vmem [resolvable:$true] %s11
  %14 = dma.vmem_to_smem %s12, 16, [#allocation5], [#allocation4]
  %15 = dma.done [#allocation4], 16
  %16 = sfence
  loop: start=0, step=1, limit=5
  $region2: #{_mrn_forward_tasks.1} parent=0 // loop_pre_header
    _
  $region3: #{_mrn_forward_tasks.1} parent=0 // loop_header
    %s18 = sphi 0, %s22
    %p19 = scmp.ge.s32.totalorder %s18, 5
    %s30 = sphi 0, %s32
    %s33 = sphi 0, %s30
    %s34 = sphi 0, %s33
    %s50 = sphi 0, %s34
    %s58 = sphi 0, %s60
    %s61 = sphi 0, %s58
    %s62 = sphi 0, %s61
    %s78 = sphi 0, %s62
    %s86 = sphi 0, %s88
    %s89 = sphi 0, %s86
    %s90 = sphi 0, %s89
    %s106 = sphi 0, %s90
    %s110 = sphi 0, %s110
    %s112 = sphi 0, %s110
    %s113 = sphi 0, %s112
    %s127 = sphi 0, %s113
    %s131 = sphi 0, %s131
    %s133 = sphi 0, %s131
    %s134 = sphi 0, %s133
    %s148 = sphi 0, %s134
    %s152 = sphi 0, %s152
    %s154 = sphi 0, %s152
    %s155 = sphi 0, %s154
    %s169 = sphi 0, %s155
  $region4: #{_mrn_forward_tasks.1} parent=0 // loop_header_branch
    %21 = sbr.rel (%p19) target = $region8
  $region5: #{_mrn_forward_tasks.1} parent=0 // loop_body
    %s23 = ssub.s32 %s18, 1
    %s24 = ssub.s32 %s18, 2
    %s25 = sadd.s32 %s18, 1
    %s26 = sld [smem:[#allocation5 + %s18]]
    %s27 = sld [smem:[#allocation5 + %s25]]
    %s28 = ssub.s32 %s26, %s27
    %p29 = scmp.eq.s32.totalorder %s28, 0
    %s31 = sadd.s32 %s30, 1
    %s32 = scalar_select %p29, %s30, %s31
    %p35 = pneg %p29
    %p36 = scmp.eq.s32.totalorder %s18, 2
    %p37 = por %p35, %p36
    %p38 = scmp.ne.s32.totalorder %s30, %s33
    %p39 = scmp.eq.s32.totalorder %s18, 0
    %p40 = por %p38, %p39
    %p41 = scmp.ne.s32.totalorder %s30, %s33
    %p42 = scmp.eq.s32.totalorder %s23, 2
    %p43 = por %p41, %p42
    %p44 = scmp.ne.s32.totalorder %s33, %s34
    %p45 = scmp.eq.s32.totalorder %s23, 0
    %p46 = por %p44, %p45
    %p47 = scmp.ne.s32.totalorder %s33, %s34
    %p48 = scmp.eq.s32.totalorder %s24, 2
    %p49 = por %p47, %p48
    %p51 = scmp.ne.s32.totalorder %s34, %s50
    %p52 = scmp.eq.s32.totalorder %s24, 0
    %p53 = por %p51, %p52
    %s54 = sld [smem:[#allocation5 + %s18]]
    %s55 = sld [smem:[#allocation5 + %s25]]
    %s56 = ssub.s32 %s54, %s55
    %p57 = scmp.eq.s32.totalorder %s56, 0
    %s59 = sadd.s32 %s58, 1
    %s60 = scalar_select %p57, %s58, %s59
    %p63 = pneg %p57
    %p64 = scmp.eq.s32.totalorder %s18, 2
    %p65 = por %p63, %p64
    %p66 = scmp.ne.s32.totalorder %s58, %s61
    %p67 = scmp.eq.s32.totalorder %s18, 0
    %p68 = por %p66, %p67
    %p69 = scmp.ne.s32.totalorder %s58, %s61
    %p70 = scmp.eq.s32.totalorder %s23, 2
    %p71 = por %p69, %p70
    %p72 = scmp.ne.s32.totalorder %s61, %s62
    %p73 = scmp.eq.s32.totalorder %s23, 0
    %p74 = por %p72, %p73
    %p75 = scmp.ne.s32.totalorder %s61, %s62
    %p76 = scmp.eq.s32.totalorder %s24, 2
    %p77 = por %p75, %p76
    %p79 = scmp.ne.s32.totalorder %s62, %s78
    %p80 = scmp.eq.s32.totalorder %s24, 0
    %p81 = por %p79, %p80
    %s82 = sld [smem:[#allocation5 + %s18]]
    %s83 = sld [smem:[#allocation5 + %s25]]
    %s84 = ssub.s32 %s82, %s83
    %p85 = scmp.eq.s32.totalorder %s84, 0
    %s87 = sadd.s32 %s86, 1
    %s88 = scalar_select %p85, %s86, %s87
    %p91 = pneg %p85
    %p92 = scmp.eq.s32.totalorder %s18, 2
    %p93 = por %p91, %p92
    %p94 = scmp.ne.s32.totalorder %s86, %s89
    %p95 = scmp.eq.s32.totalorder %s18, 0
    %p96 = por %p94, %p95
    %p97 = scmp.ne.s32.totalorder %s86, %s89
    %p98 = scmp.eq.s32.totalorder %s23, 2
    %p99 = por %p97, %p98
    %p100 = scmp.ne.s32.totalorder %s89, %s90
    %p101 = scmp.eq.s32.totalorder %s23, 0
    %p102 = por %p100, %p101
    %p103 = scmp.ne.s32.totalorder %s89, %s90
    %p104 = scmp.eq.s32.totalorder %s24, 2
    %p105 = por %p103, %p104
    %p107 = scmp.ne.s32.totalorder %s90, %s106
    %p108 = scmp.eq.s32.totalorder %s24, 0
    %p109 = por %p107, %p108
    %s111 = sadd.s32 %s110, 1
    %p114 = scmp.eq.s32.totalorder %s18, 2
    %p115 = scmp.ne.s32.totalorder %s110, %s112
    %p116 = scmp.eq.s32.totalorder %s18, 0
    %p117 = por %p115, %p116
    %p118 = scmp.ne.s32.totalorder %s110, %s112
    %p119 = scmp.eq.s32.totalorder %s23, 2
    %p120 = por %p118, %p119
    %p121 = scmp.ne.s32.totalorder %s112, %s113
    %p122 = scmp.eq.s32.totalorder %s23, 0
    %p123 = por %p121, %p122
    %p124 = scmp.ne.s32.totalorder %s112, %s113
    %p125 = scmp.eq.s32.totalorder %s24, 2
    %p126 = por %p124, %p125
    %p128 = scmp.ne.s32.totalorder %s113, %s127
    %p129 = scmp.eq.s32.totalorder %s24, 0
    %p130 = por %p128, %p129
    %s132 = sadd.s32 %s131, 1
    %p135 = scmp.eq.s32.totalorder %s18, 2
    %p136 = scmp.ne.s32.totalorder %s131, %s133
    %p137 = scmp.eq.s32.totalorder %s18, 0
    %p138 = por %p136, %p137
    %p139 = scmp.ne.s32.totalorder %s131, %s133
    %p140 = scmp.eq.s32.totalorder %s23, 2
    %p141 = por %p139, %p140
    %p142 = scmp.ne.s32.totalorder %s133, %s134
    %p143 = scmp.eq.s32.totalorder %s23, 0
    %p144 = por %p142, %p143
    %p145 = scmp.ne.s32.totalorder %s133, %s134
    %p146 = scmp.eq.s32.totalorder %s24, 2
    %p147 = por %p145, %p146
    %p149 = scmp.ne.s32.totalorder %s134, %s148
    %p150 = scmp.eq.s32.totalorder %s24, 0
    %p151 = por %p149, %p150
    %s153 = sadd.s32 %s152, 1
    %p156 = scmp.eq.s32.totalorder %s18, 2
    %p157 = scmp.ne.s32.totalorder %s152, %s154
    %p158 = scmp.eq.s32.totalorder %s18, 0
    %p159 = por %p157, %p158
    %p160 = scmp.ne.s32.totalorder %s152, %s154
    %p161 = scmp.eq.s32.totalorder %s23, 2
    %p162 = por %p160, %p161
    %p163 = scmp.ne.s32.totalorder %s154, %s155
    %p164 = scmp.eq.s32.totalorder %s23, 0
    %p165 = por %p163, %p164
    %p166 = scmp.ne.s32.totalorder %s154, %s155
    %p167 = scmp.eq.s32.totalorder %s24, 2
    %p168 = por %p166, %p167
    %p170 = scmp.ne.s32.totalorder %s155, %s169
    %p171 = scmp.eq.s32.totalorder %s24, 0
    %p172 = por %p170, %p171
    %p173 = scmp.le.s32.totalorder 1, %s18
    %p174 = scmp.lt.s32.totalorder %s18, 4
    %p175 = pnand %p173, %p174
    %p176 = pneg %p175
    // Predicated region
    $region9: #{_mrn_forward_tasks.1} parent=5 // pred_check
      _
    $region10: #{_mrn_forward_tasks.1} parent=5 // pred_check_branch
      %178 = sbr.rel (%p175) target = $region12
    $region11: #{_mrn_forward_tasks.1} parent=5 // pred_region
      %s179 = ssub.s32 %s18, 1
      // Predicated region
      $region13: #{_mrn_forward_tasks.1} parent=11 // pred_check
        %p180 = pneg %p123
      $region14: #{_mrn_forward_tasks.1} parent=11 // pred_check_branch
        %182 = sbr.rel (%p180) target = $region16
      $region15: #{_mrn_forward_tasks.1} parent=11 // pred_region
        _
      $region16: #{_mrn_forward_tasks.1} parent=11 // pred_fallthru
        _
      // Predicated region
      $region17: #{_mrn_forward_tasks.1} parent=11 // pred_check
        %p183 = pneg %p144
      $region18: #{_mrn_forward_tasks.1} parent=11 // pred_check_branch
        %185 = sbr.rel (%p183) target = $region20
      $region19: #{_mrn_forward_tasks.1} parent=11 // pred_region
        _
      $region20: #{_mrn_forward_tasks.1} parent=11 // pred_fallthru
        _
    $region12: #{_mrn_forward_tasks.1} parent=5 // pred_fallthru
      _
    %p186 = scmp.lt.s32.totalorder %s18, 3
    // Predicated region
    $region21: #{_mrn_forward_tasks.1} parent=5 // pred_check
      %p187 = pneg %p186
    $region22: #{_mrn_forward_tasks.1} parent=5 // pred_check_branch
      %189 = sbr.rel (%p187) target = $region24
    $region23: #{_mrn_forward_tasks.1} parent=5 // pred_region
      // Predicated region
      $region25: #{_mrn_forward_tasks.1} parent=23 // pred_check
        %p190 = pneg %p40
      $region26: #{_mrn_forward_tasks.1} parent=23 // pred_check_branch
        %192 = sbr.rel (%p190) target = $region28
      $region27: #{_mrn_forward_tasks.1} parent=23 // pred_region
        %s193 = sld [smem:[#allocation5 + %s18]]
        %p194 = scmp.lt.s32.totalorder %s193, 2
        %s195 = scalar_select %p194, %s193, 2
        %s196 = smul.addr %s195, 4
        %s197 = scalar_lea.vmem %s1, %s196
        %s198 = sld [smem:[#allocation5 + %s18]]
      $region28: #{_mrn_forward_tasks.1} parent=23 // pred_fallthru
        _
      // Predicated region
      $region29: #{_mrn_forward_tasks.1} parent=23 // pred_check
        %p199 = pneg %p68
      $region30: #{_mrn_forward_tasks.1} parent=23 // pred_check_branch
        %201 = sbr.rel (%p199) target = $region32
      $region31: #{_mrn_forward_tasks.1} parent=23 // pred_region
        %s202 = sld [smem:[#allocation5 + %s18]]
        %p203 = scmp.lt.s32.totalorder %s202, 2
        %s204 = scalar_select %p203, %s202, 2
        %s205 = smul.addr %s204, 2
        %s206 = smul.addr %s205, 4
        %s207 = scalar_lea.vmem %s2, %s206
        %s208 = sld [smem:[#allocation5 + %s18]]
      $region32: #{_mrn_forward_tasks.1} parent=23 // pred_fallthru
        _
      // Predicated region
      $region33: #{_mrn_forward_tasks.1} parent=23 // pred_check
        %p209 = pneg %p96
      $region34: #{_mrn_forward_tasks.1} parent=23 // pred_check_branch
        %211 = sbr.rel (%p209) target = $region36
      $region35: #{_mrn_forward_tasks.1} parent=23 // pred_region
        %s212 = sld [smem:[#allocation5 + %s18]]
        %p213 = scmp.lt.s32.totalorder %s212, 2
        %s214 = scalar_select %p213, %s212, 2
        %s215 = scalar_lea.vmem %s3, %s214
        %s216 = sld [smem:[#allocation5 + %s18]]
      $region36: #{_mrn_forward_tasks.1} parent=23 // pred_fallthru
        _
    $region24: #{_mrn_forward_tasks.1} parent=5 // pred_fallthru
      _
    %p217 = scmp.le.s32.totalorder 1, %s18
    %p218 = scmp.lt.s32.totalorder %s18, 4
    %p219 = pnand %p217, %p218
    %p220 = pneg %p219
    // Predicated region
    $region37: #{_mrn_forward_tasks.1} parent=5 // pred_check
      _
    $region38: #{_mrn_forward_tasks.1} parent=5 // pred_check_branch
      %222 = sbr.rel (%p219) target = $region40
    $region39: #{_mrn_forward_tasks.1} parent=5 // pred_region
      %s223 = ssub.s32 %s18, 1
      %s224 = sld [smem:[#allocation5 + %s23]]
      %p225 = scmp.lt.s32.totalorder %s224, 2
      %s226 = scalar_select %p225, %s224, 2
      %s227 = smul.addr %s226, 4
      %s228 = scalar_lea.vmem %s1, %s227
      %p229 = pneg %p46
      %p230 = pneg %p43
      %s231 = sld [smem:[#allocation5 + %s23]]
      %p232 = scmp.lt.s32.totalorder %s231, 2
      %s233 = scalar_select %p232, %s231, 2
      %s234 = smul.addr %s233, 2
      %s235 = smul.addr %s234, 4
      %s236 = scalar_lea.vmem %s2, %s235
      %p237 = pneg %p74
      %p238 = pneg %p71
      %s239 = sld [smem:[#allocation5 + %s23]]
      %p240 = scmp.lt.s32.totalorder %s239, 2
      %s241 = scalar_select %p240, %s239, 2
      %s242 = scalar_lea.vmem %s3, %s241
      %p243 = pneg %p102
      %p244 = pneg %p99
      %p245 = pneg %p123
      %p246 = pneg %p120
      %p247 = pneg %p144
      %p248 = pneg %p141
      %p249 = pneg %p165
      %p250 = pneg %p162
      %s251 = sld [smem:[#allocation5 + %s23]]
      %p252 = scmp.lt.s32.totalorder %s251, 2
      %s253 = scalar_select %p252, %s251, 2
      %s254 = smul.addr %s253, 4
      %s255 = scalar_lea.vmem %s1, %s254
      %s256 = sld [smem:[#allocation5 + %s23]]
      %s257 = sld [smem:[#allocation5 + %s23]]
      %p258 = scmp.lt.s32.totalorder %s257, 2
      %s259 = scalar_select %p258, %s257, 2
      %s260 = smul.addr %s259, 2
      %s261 = smul.addr %s260, 4
      %s262 = scalar_lea.vmem %s2, %s261
      %s263 = sld [smem:[#allocation5 + %s23]]
      %s264 = sld [smem:[#allocation5 + %s23]]
      %p265 = scmp.lt.s32.totalorder %s264, 2
      %s266 = scalar_select %p265, %s264, 2
      %s267 = scalar_lea.vmem %s3, %s266
      %s268 = sld [smem:[#allocation5 + %s23]]
      %v270 = vld [vmem:[%s255] sm:$0xf]
      %v271 = vld [vmem:[%s262] sm:$0xf]
      %v272 = vld [vmem:[%s262 + $0x4] sm:$0xf]
      %v273 = vld [vmem:[%s267] sm:$0x1]
      %v275 = vlaneseq
      %v276 = vshrl.u32 %v275, 7
      %v277 = vsub.s32 0, %v276
      %v278 = vrot.slane %v273, %v277
      %v282 = vunpack.c.l.b16 %v271
      %v283 = vunpack.c.l.b16 %v272
      %v284 = vpack.c.b16 %v283, %v282
      %vm285 = vcmask 261120
      %v287 = vsel %vm285, %v270, 0
      %v290 = vsel %vm285, %v284, 0
      %292 = vmatprep.subr.bf16.mxu0 0
      %293 = vmatpush1.bf16.xpose.msra.mxu0 %v290
      %294 = vmatprep.subr.bf16.mxu0 0
      %295 = vmatpush1.bf16.xpose.msra.mxu0 0
      %296 = vmatprep.subr.bf16.mxu0 0
      %297 = vmatpush1.bf16.xpose.msra.mxu0 0
      %298 = vmatprep.subr.bf16.mxu0 0
      %299 = vmatpush1.bf16.xpose.msra.mxu0 0
      %300 = vmatprep.subr.bf16.mxu0 0
      %301 = vmatpush1.bf16.xpose.msra.mxu0 0
      %302 = vmatprep.subr.bf16.mxu0 0
      %303 = vmatpush1.bf16.xpose.msra.mxu0 0
      %304 = vmatprep.subr.bf16.mxu0 0
      %305 = vmatpush1.bf16.xpose.msra.mxu0 0
      %306 = vmatprep.subr.bf16.mxu0 0
      %307 = vmatpush1.bf16.xpose.msra.mxu0 0
      %308 = vmatprep.subr.bf16.mxu0 0
      %309 = vmatpush1.bf16.xpose.msra.mxu0 0
      %310 = vmatprep.subr.bf16.mxu0 0
      %311 = vmatpush1.bf16.xpose.msra.mxu0 0
      %312 = vmatprep.subr.bf16.mxu0 0
      %313 = vmatpush1.bf16.xpose.msra.mxu0 0
      %314 = vmatprep.subr.bf16.mxu0 0
      %315 = vmatpush1.bf16.xpose.msra.mxu0 0
      %316 = vmatprep.subr.bf16.mxu0 0
      %317 = vmatpush1.bf16.xpose.msra.mxu0 0
      %318 = vmatprep.subr.bf16.mxu0 0
      %319 = vmatpush1.bf16.xpose.msra.mxu0 0
      %320 = vmatprep.subr.bf16.mxu0 0
      %321 = vmatpush1.bf16.xpose.msra.mxu0 0
      %322 = vmatprep.subr.bf16.mxu0 0
      %323 = vmatpush1.bf16.xpose.msra.mxu0 0
      %324 = vmatprep.mubr.bf16.mxu0 0
      %325 = vmatmul.mubr.bf16.gmra.mrb[0].mxu0 %v287
      %v326 = vpop.f32.mrb[0].mxu0
      %v327 = vadd.f32 %v278, %v326
      %v328 = vpop.f32.mrb[0].mxu0
      %v329 = vpop.f32.mrb[0].mxu0
      %v330 = vpop.f32.mrb[0].mxu0
      %331 = vdwg.mxu0
      %v332 = vmax.f32 %v327, 0.0
      %p333 = scmp.eq.s32.totalorder %s23, 0
      // Predicated region
      $region41: #{_mrn_forward_tasks.1} parent=39 // pred_check
        %p334 = pneg %p333
      $region42: #{_mrn_forward_tasks.1} parent=39 // pred_check_branch
        %336 = sbr.rel (%p334) target = $region44
      $region43: #{_mrn_forward_tasks.1} parent=39 // pred_region
        %vm337 = vcmask 122880
        %338 = vst.msk [vmem:[#allocation2] sm:$0x1] %vm337, 0.0
        %339 = vst.msk [vmem:[#allocation3] sm:$0x1] %vm337, 0.0
      $region44: #{_mrn_forward_tasks.1} parent=39 // pred_fallthru
        _
      %v340 = vld [vmem:[#allocation2] sm:$0x1]
      %vm341 = vcmask 130048
      %v342 = vsel %vm341, %v332, 0.0
      %v343 = vrot.slane %v342, 4
      %v344 = vadd.f32 %v342, %v343
      %v345 = vrot.slane %v344, 2
      %v346 = vadd.f32 %v344, %v345
      %v347 = vrot.slane %v346, 1
      %v348 = vadd.f32 %v346, %v347
      %v349 = vadd.f32 %v340, %v348
      %vm350 = vcmask 122880
      %351 = vst.msk [vmem:[#allocation2] sm:$0x1] %vm350, %v349
      %v352 = vld [vmem:[#allocation3] sm:$0x1]
      %v353 = vmul.f32 %v332, %v332
      %v354 = vsel %vm341, %v353, 0.0
      %v355 = vrot.slane %v354, 4
      %v356 = vadd.f32 %v354, %v355
      %v357 = vrot.slane %v356, 2
      %v358 = vadd.f32 %v356, %v357
      %v359 = vrot.slane %v358, 1
      %v360 = vadd.f32 %v358, %v359
      %v361 = vadd.f32 %v352, %v360
      %362 = vst.msk [vmem:[#allocation3] sm:$0x1] %vm350, %v361
      // Predicated region
      $region45: #{_mrn_forward_tasks.1} parent=39 // pred_check
        %p363 = pneg %p333
      $region46: #{_mrn_forward_tasks.1} parent=39 // pred_check_branch
        %365 = sbr.rel (%p363) target = $region48
      $region47: #{_mrn_forward_tasks.1} parent=39 // pred_region
        %v367 = vcombine.high %v332, %v332
        %v369 = vunpack.c.l.s4 1966171168
        %v370 = vunpack.c.0.s8 %v369
        %v371 = vlaneseq
        %v372 = vshrl.u32 %v371, 7
        %v373 = vsub.s32 %v370, %v372
        %v374 = vrot.slane %v332, %v373
        %v376 = vunpack.c.l.s4 1966171168
        %v377 = vunpack.c.0.s8 %v376
        %v378 = vlaneseq
        %v379 = vshrl.u32 %v378, 7
        %v380 = vsub.s32 %v377, %v379
        %v381 = vrot.slane %v367, %v380
        %v382 = vcombine.high %v374, %v374
        %v383 = vcombine.high %v381, %v381
        %v385 = vunpack.c.l.s4 1966171168
        %v386 = vunpack.c.0.s8 %v385
        %v387 = vlaneseq
        %v388 = vshrl.u32 %v387, 7
        %v389 = vsub.s32 %v386, %v388
        %v390 = vrot.slane %v374, %v389
        %v392 = vunpack.c.l.s4 1966171168
        %v393 = vunpack.c.0.s8 %v392
        %v394 = vlaneseq
        %v395 = vshrl.u32 %v394, 7
        %v396 = vsub.s32 %v393, %v395
        %v397 = vrot.slane %v381, %v396
        %v399 = vunpack.c.l.s4 1966171168
        %v400 = vunpack.c.0.s8 %v399
        %v401 = vlaneseq
        %v402 = vshrl.u32 %v401, 7
        %v403 = vsub.s32 %v400, %v402
        %v404 = vrot.slane %v382, %v403
        %v406 = vunpack.c.l.s4 1966171168
        %v407 = vunpack.c.0.s8 %v406
        %v408 = vlaneseq
        %v409 = vshrl.u32 %v408, 7
        %v410 = vsub.s32 %v407, %v409
        %v411 = vrot.slane %v383, %v410
        %v412 = vcombine.high %v390, %v390
        %v413 = vcombine.high %v397, %v397
        %v414 = vcombine.high %v404, %v404
        %v415 = vcombine.high %v411, %v411
        %424 = vst.msk [vmem:[%s6] sm:$0x1] %vm350, %v390
        %425 = vst.msk [vmem:[%s6 + $0x4] sm:$0x1] %vm350, %v404
        %426 = vst.msk [vmem:[%s6 + $0x8] sm:$0x1] %vm350, %v412
        %427 = vst.msk [vmem:[%s6 + $0xc] sm:$0x1] %vm350, %v414
        %428 = vst.msk [vmem:[%s6 + $0x10] sm:$0x1] %vm350, %v397
        %429 = vst.msk [vmem:[%s6 + $0x14] sm:$0x1] %vm350, %v411
        %430 = vst.msk [vmem:[%s6 + $0x18] sm:$0x1] %vm350, %v413
        %431 = vst.msk [vmem:[%s6 + $0x1c] sm:$0x1] %vm350, %v415
      $region48: #{_mrn_forward_tasks.1} parent=39 // pred_fallthru
        _
      %p432 = scmp.eq.s32.totalorder %s23, 1
      // Predicated region
      $region49: #{_mrn_forward_tasks.1} parent=39 // pred_check
        %p433 = pneg %p432
      $region50: #{_mrn_forward_tasks.1} parent=39 // pred_check_branch
        %435 = sbr.rel (%p433) target = $region52
      $region51: #{_mrn_forward_tasks.1} parent=39 // pred_region
        %v437 = vcombine.high %v332, %v332
        %v439 = vunpack.c.l.s4 1966171168
        %v440 = vunpack.c.0.s8 %v439
        %v441 = vlaneseq
        %v442 = vshrl.u32 %v441, 7
        %v443 = vsub.s32 %v440, %v442
        %v444 = vrot.slane %v332, %v443
        %v446 = vunpack.c.l.s4 1966171168
        %v447 = vunpack.c.0.s8 %v446
        %v448 = vlaneseq
        %v449 = vshrl.u32 %v448, 7
        %v450 = vsub.s32 %v447, %v449
        %v451 = vrot.slane %v437, %v450
        %v452 = vcombine.high %v444, %v444
        %v453 = vcombine.high %v451, %v451
        %v455 = vunpack.c.l.s4 1966171168
        %v456 = vunpack.c.0.s8 %v455
        %v457 = vlaneseq
        %v458 = vshrl.u32 %v457, 7
        %v459 = vsub.s32 %v456, %v458
        %v460 = vrot.slane %v444, %v459
        %v462 = vunpack.c.l.s4 1966171168
        %v463 = vunpack.c.0.s8 %v462
        %v464 = vlaneseq
        %v465 = vshrl.u32 %v464, 7
        %v466 = vsub.s32 %v463, %v465
        %v467 = vrot.slane %v451, %v466
        %v469 = vunpack.c.l.s4 1966171168
        %v470 = vunpack.c.0.s8 %v469
        %v471 = vlaneseq
        %v472 = vshrl.u32 %v471, 7
        %v473 = vsub.s32 %v470, %v472
        %v474 = vrot.slane %v452, %v473
        %v476 = vunpack.c.l.s4 1966171168
        %v477 = vunpack.c.0.s8 %v476
        %v478 = vlaneseq
        %v479 = vshrl.u32 %v478, 7
        %v480 = vsub.s32 %v477, %v479
        %v481 = vrot.slane %v453, %v480
        %v482 = vcombine.high %v460, %v460
        %v483 = vcombine.high %v467, %v467
        %v484 = vcombine.high %v474, %v474
        %v485 = vcombine.high %v481, %v481
        %494 = vst.msk [vmem:[%s6 + $0x1] sm:$0x1] %vm350, %v460
        %495 = vst.msk [vmem:[%s6 + $0x5] sm:$0x1] %vm350, %v474
        %496 = vst.msk [vmem:[%s6 + $0x9] sm:$0x1] %vm350, %v482
        %497 = vst.msk [vmem:[%s6 + $0xd] sm:$0x1] %vm350, %v484
        %498 = vst.msk [vmem:[%s6 + $0x11] sm:$0x1] %vm350, %v467
        %499 = vst.msk [vmem:[%s6 + $0x15] sm:$0x1] %vm350, %v481
        %500 = vst.msk [vmem:[%s6 + $0x19] sm:$0x1] %vm350, %v483
        %501 = vst.msk [vmem:[%s6 + $0x1d] sm:$0x1] %vm350, %v485
      $region52: #{_mrn_forward_tasks.1} parent=39 // pred_fallthru
        _
      %p502 = scmp.eq.s32.totalorder %s23, 2
      // Predicated region
      $region53: #{_mrn_forward_tasks.1} parent=39 // pred_check
        %p503 = pneg %p502
      $region54: #{_mrn_forward_tasks.1} parent=39 // pred_check_branch
        %505 = sbr.rel (%p503) target = $region56
      $region55: #{_mrn_forward_tasks.1} parent=39 // pred_region
        %v507 = vcombine.high %v332, %v332
        %v509 = vunpack.c.l.s4 1966171168
        %v510 = vunpack.c.0.s8 %v509
        %v511 = vlaneseq
        %v512 = vshrl.u32 %v511, 7
        %v513 = vsub.s32 %v510, %v512
        %v514 = vrot.slane %v332, %v513
        %v516 = vunpack.c.l.s4 1966171168
        %v517 = vunpack.c.0.s8 %v516
        %v518 = vlaneseq
        %v519 = vshrl.u32 %v518, 7
        %v520 = vsub.s32 %v517, %v519
        %v521 = vrot.slane %v507, %v520
        %v522 = vcombine.high %v514, %v514
        %v523 = vcombine.high %v521, %v521
        %v525 = vunpack.c.l.s4 1966171168
        %v526 = vunpack.c.0.s8 %v525
        %v527 = vlaneseq
        %v528 = vshrl.u32 %v527, 7
        %v529 = vsub.s32 %v526, %v528
        %v530 = vrot.slane %v514, %v529
        %v532 = vunpack.c.l.s4 1966171168
        %v533 = vunpack.c.0.s8 %v532
        %v534 = vlaneseq
        %v535 = vshrl.u32 %v534, 7
        %v536 = vsub.s32 %v533, %v535
        %v537 = vrot.slane %v521, %v536
        %v539 = vunpack.c.l.s4 1966171168
        %v540 = vunpack.c.0.s8 %v539
        %v541 = vlaneseq
        %v542 = vshrl.u32 %v541, 7
        %v543 = vsub.s32 %v540, %v542
        %v544 = vrot.slane %v522, %v543
        %v546 = vunpack.c.l.s4 1966171168
        %v547 = vunpack.c.0.s8 %v546
        %v548 = vlaneseq
        %v549 = vshrl.u32 %v548, 7
        %v550 = vsub.s32 %v547, %v549
        %v551 = vrot.slane %v523, %v550
        %v552 = vcombine.high %v530, %v530
        %v553 = vcombine.high %v537, %v537
        %v554 = vcombine.high %v544, %v544
        %v555 = vcombine.high %v551, %v551
        %564 = vst.msk [vmem:[%s6 + $0x2] sm:$0x1] %vm350, %v530
        %565 = vst.msk [vmem:[%s6 + $0x6] sm:$0x1] %vm350, %v544
        %566 = vst.msk [vmem:[%s6 + $0xa] sm:$0x1] %vm350, %v552
        %567 = vst.msk [vmem:[%s6 + $0xe] sm:$0x1] %vm350, %v554
        %568 = vst.msk [vmem:[%s6 + $0x12] sm:$0x1] %vm350, %v537
        %569 = vst.msk [vmem:[%s6 + $0x16] sm:$0x1] %vm350, %v551
        %570 = vst.msk [vmem:[%s6 + $0x1a] sm:$0x1] %vm350, %v553
        %571 = vst.msk [vmem:[%s6 + $0x1e] sm:$0x1] %vm350, %v555
        %v572 = vld [vmem:[#allocation2] sm:$0x1]
        %v573 = vmul.f32 %v572, 0.041666668
        %v574 = vld [vmem:[#allocation3] sm:$0x1]
        %v575 = vmul.f32 %v574, 0.041666668
        %v576 = vmul.f32 %v573, %v573
        %v577 = vsub.f32 %v575, %v576
        %v578 = vadd.f32 %v577, 1e-05
        %v579 = vrsqrt.pop %v578
        %v580 = vld [vmem:[%s4] sm:$0x1]
        %v581 = vmul.f32 %v579, %v580
        %v582 = vld [vmem:[%s5] sm:$0x1]
        %v583 = vmul.f32 %v573, %v581
        %v584 = vsub.f32 %v582, %v583
        %v585 = vld [vmem:[%s6] sm:$0x7]
        %v586 = vld [vmem:[%s6 + $0x4] sm:$0x7]
        %v587 = vld [vmem:[%s6 + $0x8] sm:$0x7]
        %v588 = vld [vmem:[%s6 + $0xc] sm:$0x7]
        %v589 = vld [vmem:[%s6 + $0x10] sm:$0x7]
        %v590 = vld [vmem:[%s6 + $0x14] sm:$0x7]
        %v591 = vld [vmem:[%s6 + $0x18] sm:$0x7]
        %v592 = vld [vmem:[%s6 + $0x1c] sm:$0x7]
        %v594 = vlaneseq
        %v595 = vshrl.u32 %v594, 7
        %v596 = vsub.s32 0, %v595
        %v597 = vrot.slane %v581, %v596
        %v599 = vmul.f32 %v585, %v597
        %v600 = vmul.f32 %v586, %v597
        %v601 = vmul.f32 %v587, %v597
        %v602 = vmul.f32 %v588, %v597
        %v603 = vmul.f32 %v589, %v597
        %v604 = vmul.f32 %v590, %v597
        %v605 = vmul.f32 %v591, %v597
        %v606 = vmul.f32 %v592, %v597
        %v608 = vlaneseq
        %v609 = vshrl.u32 %v608, 7
        %v610 = vsub.s32 0, %v609
        %v611 = vrot.slane %v584, %v610
        %v613 = vadd.f32 %v599, %v611
        %v614 = vadd.f32 %v600, %v611
        %v615 = vadd.f32 %v601, %v611
        %v616 = vadd.f32 %v602, %v611
        %v617 = vadd.f32 %v603, %v611
        %v618 = vadd.f32 %v604, %v611
        %v619 = vadd.f32 %v605, %v611
        %v620 = vadd.f32 %v606, %v611
        %vm621 = vcmask 124928
        %622 = vst.msk [vmem:[%s6] sm:$0x7] %vm621, %v613
        %623 = vst.msk [vmem:[%s6 + $0x4] sm:$0x7] %vm621, %v614
        %624 = vst.msk [vmem:[%s6 + $0x8] sm:$0x7] %vm621, %v615
        %625 = vst.msk [vmem:[%s6 + $0xc] sm:$0x7] %vm621, %v616
        %626 = vst.msk [vmem:[%s6 + $0x10] sm:$0x7] %vm621, %v617
        %627 = vst.msk [vmem:[%s6 + $0x14] sm:$0x7] %vm621, %v618
        %628 = vst.msk [vmem:[%s6 + $0x18] sm:$0x7] %vm621, %v619
        %629 = vst.msk [vmem:[%s6 + $0x1c] sm:$0x7] %vm621, %v620
      $region56: #{_mrn_forward_tasks.1} parent=39 // pred_fallthru
        _
      // Predicated region
      $region57: #{_mrn_forward_tasks.1} parent=39 // pred_check
        %p630 = pneg %p162
      $region58: #{_mrn_forward_tasks.1} parent=39 // pred_check_branch
        %632 = sbr.rel (%p630) target = $region60
      $region59: #{_mrn_forward_tasks.1} parent=39 // pred_region
        _
      $region60: #{_mrn_forward_tasks.1} parent=39 // pred_fallthru
        _
      // Predicated region
      $region61: #{_mrn_forward_tasks.1} parent=39 // pred_check
        %p633 = pneg %p162
      $region62: #{_mrn_forward_tasks.1} parent=39 // pred_check_branch
        %635 = sbr.rel (%p633) target = $region64
      $region63: #{_mrn_forward_tasks.1} parent=39 // pred_region
        _
      $region64: #{_mrn_forward_tasks.1} parent=39 // pred_fallthru
        _
    $region40: #{_mrn_forward_tasks.1} parent=5 // pred_fallthru
      _
    %p636 = scmp.le.s32.totalorder 2, %s18
    // Predicated region
    $region65: #{_mrn_forward_tasks.1} parent=5 // pred_check
      %p637 = pneg %p636
    $region66: #{_mrn_forward_tasks.1} parent=5 // pred_check_branch
      %639 = sbr.rel (%p637) target = $region68
    $region67: #{_mrn_forward_tasks.1} parent=5 // pred_region
      %s640 = ssub.s32 %s18, 2
    $region68: #{_mrn_forward_tasks.1} parent=5 // pred_fallthru
      _
  $region6: #{_mrn_forward_tasks.1} parent=0 // loop_footer
    %s22 = sadd.s32 1, %s18
  $region7: #{_mrn_forward_tasks.1} parent=0 // loop_footer_branch
    %17 = sbr.rel target = $region3
  $region8: #{_mrn_forward_tasks.1} parent=0 // loop_exit
    _

</llo_original>
